<compile_context>
chip_gen: v7x
topology: tpu7x:2x2x1
jax: 0.10.0
libtpu: 0.0.40
codegen_flags: <defaults>
</compile_context>

<pallas_src>
import functools

import jax
import jax.numpy as jnp
from jax.experimental import pallas as pl
from jax.experimental.pallas import tpu as pltpu

BN_EPS = 1e-5


def item_policy_kernel(act_ref, par_ref, o_ref, *, d_in):
    # act_ref : [B, K] f32, K = d_in + block_num
    #             cols [0, d_in)   = x
    #             cols [d_in, K)   = selected block id, replicated (exact ints in f32)
    # par_ref : [K + 2, D_out] f32
    #             rows [0, d_in)   = W (Linear weight, already transposed)
    #             rows [d_in, K)   = emb_table @ W   (precomputed offline)
    #             row  K           = BN gamma
    #             row  K + 1       = BN beta
    # o_ref   : [B, D_out] f32
    B, K = act_ref.shape
    act = act_ref[...]

    # --- build lhs = [x | one_hot(ids)] with a single iota/compare/select ---------
    cols = jax.lax.broadcasted_iota(jnp.int32, (B, K), 1)
    ids_i = act.astype(jnp.int32)                          # only meaningful where cols >= d_in
    one_hot = ((cols - d_in) == ids_i).astype(jnp.float32)
    lhs = jnp.where(cols < d_in, act, one_hot)             # [B, K]

    # --- single MXU call: (x + one_hot @ emb) @ W == [x | one_hot] @ [W ; emb@W] --
    # Linear bias omitted: exactly cancelled by training-mode BN mean subtraction.
    z = jnp.dot(lhs, par_ref[:K, :], preferred_element_type=jnp.float32)   # [B, D_out]

    # --- BatchNorm1d, training mode (batch mean, biased variance), one pass -------
    inv_b = 1.0 / B
    mean = jnp.sum(z, axis=0, keepdims=True) * inv_b                # [1, D_out]
    mean_sq = jnp.sum(z * z, axis=0, keepdims=True) * inv_b         # [1, D_out]
    var = jnp.maximum(mean_sq - mean * mean, 0.0)                   # clamp: can round < 0

    gamma = par_ref[K:K + 1, :]
    beta = par_ref[K + 1:K + 2, :]
    s = gamma * jax.lax.rsqrt(var + BN_EPS)                         # folded BN scale
    t = beta - mean * s                                             # folded BN shift

    # --- BN affine + ReLU ----------------------------------------------------------
    a = jnp.maximum(z * s + t, 0.0)

    # --- softmax over dim=1 (divide -> EUP reciprocal) ------------------------------
    m = jnp.max(a, axis=1, keepdims=True)
    e = jnp.exp(a - m)
    denom = jnp.sum(e, axis=1, keepdims=True)
    o_ref[...] = e * pl.reciprocal(denom, approx=False)


def prepare_params(emb_table, w, gamma, beta):
    """One-time parameter packing. Keep OUT of the per-call jitted path.

    w is the Linear weight already transposed to [D_in, D_out].
    Returns a single [D_in + block_num + 2, D_out] f32 slab (one kernel operand):
      rows [0, D_in)               : W
      rows [D_in, D_in+block_num)  : emb_table @ W   (distributed embedding gather)
      row  D_in+block_num          : BN gamma
      row  D_in+block_num+1        : BN beta
    The Linear bias is intentionally dropped (exact cancellation by training-mode BN).
    """
    w = jnp.asarray(w, jnp.float32)
    ew = jnp.asarray(emb_table, jnp.float32) @ w
    gb = jnp.stack([jnp.asarray(gamma, jnp.float32),
                    jnp.asarray(beta, jnp.float32)], axis=0)
    return jnp.concatenate([w, ew, gb], axis=0)


@jax.jit
def item_policy_forward(x, selected_block_ids, params):
    """x: [B, D_in] f32, selected_block_ids: [B] int,
    params: slab from prepare_params. Returns [B, D_out] f32."""
    B, d_in = x.shape
    n_rows, d_out = params.shape
    block_num = n_rows - d_in - 2

    # Fold the ids into the activation DMA: one [B, d_in + block_num] slab,
    # ids replicated over the one-hot columns (small ints, exact in f32).
    ids_f = selected_block_ids.astype(jnp.float32).reshape(B, 1)
    act = jnp.concatenate(
        [x.astype(jnp.float32), jnp.broadcast_to(ids_f, (B, block_num))], axis=1)

    vmem = pl.BlockSpec(memory_space=pltpu.MemorySpace.VMEM)
    return pl.pallas_call(
        functools.partial(item_policy_kernel, d_in=d_in),
        out_shape=jax.ShapeDtypeStruct((B, d_out), jnp.float32),
        in_specs=[vmem, vmem],
        out_specs=vmem,
    )(act, params)


def reference_forward(x, selected_block_ids, emb_table, w, b, gamma, beta):
    """Faithful pure-JAX reference of the PyTorch module (bias included,
    two-pass batch statistics)."""
    emb = jnp.take(emb_table, selected_block_ids, axis=0)
    h = x + emb
    z = h @ w + b[None, :]
    mean = jnp.mean(z, axis=0, keepdims=True)
    var = jnp.mean((z - mean) ** 2, axis=0, keepdims=True)
    zn = (z - mean) / jnp.sqrt(var + BN_EPS) * gamma[None, :] + beta[None, :]
    a = jnp.maximum(zn, 0.0)
    return jax.nn.softmax(a, axis=1)


if __name__ == "__main__":
    # Small deterministic shapes consistent with the module.
    batch = 8
    input_dim = 32      # block_dim
    output_dim = 16
    block_num = 10

    key = jax.random.PRNGKey(0)
    k_x, k_ids, k_emb, k_w, k_b, k_g, k_be = jax.random.split(key, 7)

    x = jax.random.normal(k_x, (batch, input_dim), dtype=jnp.float32)
    selected_block_ids = jax.random.randint(
        k_ids, (batch,), 0, block_num, dtype=jnp.int32)

    # Synthetic parameters (shapes follow the module __init__).
    emb_table = jax.random.normal(k_emb, (block_num, input_dim), dtype=jnp.float32)
    w = jax.random.normal(k_w, (input_dim, output_dim), dtype=jnp.float32) * 0.1
    b = jax.random.normal(k_b, (output_dim,), dtype=jnp.float32) * 0.1
    gamma = 1.0 + 0.05 * jax.random.normal(k_g, (output_dim,), dtype=jnp.float32)
    beta = 0.05 * jax.random.normal(k_be, (output_dim,), dtype=jnp.float32)

    # One-time parameter packing (outside the jitted per-call path).
    params = prepare_params(emb_table, w, gamma, beta)
    params = jax.block_until_ready(params)

    out = item_policy_forward(x, selected_block_ids, params)
    out = jax.block_until_ready(out)

    ref = reference_forward(x, selected_block_ids, emb_table, w, b, gamma, beta)
    assert out.shape == (batch, output_dim)
    assert jnp.allclose(out, ref, atol=1e-5, rtol=1e-5), "mismatch vs reference"
    # rows of a softmax sum to 1
    assert jnp.allclose(jnp.sum(out, axis=1), jnp.ones((batch,)), atol=1e-5)

    print("KERNEL_OK")
</pallas_src>

<mosaic_0001>
module attributes {stable_mosaic.version = 11 : i64} {
  func.func @item_policy_kernel(%arg0: memref<8x42xf32, #tpu.memory_space<vmem>>, %arg1: memref<44x16xf32, #tpu.memory_space<vmem>>, %arg2: memref<8x16xf32, #tpu.memory_space<vmem>>) attributes {dimension_semantics = [], scalar_prefetch = 0 : i64, scratch_operands = 0 : i64, tpu.core_type = #tpu.core_type<tc>} {
    %c0 = arith.constant 0 : index
    %c0_0 = arith.constant 0 : index
    %0 = vector.load %arg0[%c0, %c0_0] : memref<8x42xf32, #tpu.memory_space<vmem>>, vector<8x42xf32>
    %1 = tpu.iota {dimensions = array<i32: 1>} : vector<8x42xi32>
    %2 = arith.fptosi %0 : vector<8x42xf32> to vector<8x42xi32>
    %c32_i32 = arith.constant 32 : i32
    %3 = vector.broadcast %c32_i32 : i32 to vector<8x42xi32>
    %4 = arith.subi %1, %3 : vector<8x42xi32>
    %5 = arith.cmpi eq, %4, %2 : vector<8x42xi32>
    %6 = arith.extui %5 : vector<8x42xi1> to vector<8x42xi32>
    %7 = arith.sitofp %6 : vector<8x42xi32> to vector<8x42xf32>
    %c32_i32_1 = arith.constant 32 : i32
    %8 = vector.broadcast %c32_i32_1 : i32 to vector<8x42xi32>
    %9 = arith.cmpi slt, %1, %8 : vector<8x42xi32>
    %10 = arith.select %9, %0, %7 : vector<8x42xi1>, vector<8x42xf32>
    %c0_2 = arith.constant 0 : index
    %c0_3 = arith.constant 0 : index
    %11 = vector.load %arg1[%c0_2, %c0_3] : memref<44x16xf32, #tpu.memory_space<vmem>>, vector<42x16xf32>
    %cst = arith.constant dense<0.000000e+00> : vector<8x16xf32>
    %12 = tpu.matmul %10, %11, %cst {dimension_numbers = #tpu.dot_dimension_numbers<[1], [0], [0], [1], [0, 0, 1, 1], [], []>} : vector<8x42xf32>, vector<42x16xf32>, vector<8x16xf32> -> vector<8x16xf32>
    %cst_4 = arith.constant dense<0.000000e+00> : vector<16xf32>
    %13 = vector.multi_reduction <add>, %12, %cst_4 [0] : vector<8x16xf32> to vector<16xf32>
    %14 = vector.shape_cast %13 : vector<16xf32> to vector<1x16xf32>
    %cst_5 = arith.constant 1.250000e-01 : f32
    %15 = vector.broadcast %cst_5 : f32 to vector<1x16xf32>
    %16 = arith.mulf %14, %15 : vector<1x16xf32>
    %17 = arith.mulf %12, %12 : vector<8x16xf32>
    %cst_6 = arith.constant dense<0.000000e+00> : vector<16xf32>
    %18 = vector.multi_reduction <add>, %17, %cst_6 [0] : vector<8x16xf32> to vector<16xf32>
    %19 = vector.shape_cast %18 : vector<16xf32> to vector<1x16xf32>
    %cst_7 = arith.constant 1.250000e-01 : f32
    %20 = vector.broadcast %cst_7 : f32 to vector<1x16xf32>
    %21 = arith.mulf %19, %20 : vector<1x16xf32>
    %22 = arith.mulf %16, %16 : vector<1x16xf32>
    %23 = arith.subf %21, %22 : vector<1x16xf32>
    %cst_8 = arith.constant 0.000000e+00 : f32
    %24 = vector.broadcast %cst_8 : f32 to vector<1x16xf32>
    %25 = arith.maximumf %23, %24 : vector<1x16xf32>
    %c42 = arith.constant 42 : index
    %c0_9 = arith.constant 0 : index
    %26 = vector.load %arg1[%c42, %c0_9] : memref<44x16xf32, #tpu.memory_space<vmem>>, vector<1x16xf32>
    %c43 = arith.constant 43 : index
    %c0_10 = arith.constant 0 : index
    %27 = vector.load %arg1[%c43, %c0_10] : memref<44x16xf32, #tpu.memory_space<vmem>>, vector<1x16xf32>
    %cst_11 = arith.constant 9.99999974E-6 : f32
    %28 = vector.broadcast %cst_11 : f32 to vector<1x16xf32>
    %29 = arith.addf %25, %28 : vector<1x16xf32>
    %30 = math.rsqrt %29 : vector<1x16xf32>
    %31 = arith.mulf %26, %30 : vector<1x16xf32>
    %32 = arith.mulf %16, %31 : vector<1x16xf32>
    %33 = arith.subf %27, %32 : vector<1x16xf32>
    %34 = vector.broadcast %31 : vector<1x16xf32> to vector<8x16xf32>
    %35 = arith.mulf %12, %34 : vector<8x16xf32>
    %36 = vector.broadcast %33 : vector<1x16xf32> to vector<8x16xf32>
    %37 = arith.addf %35, %36 : vector<8x16xf32>
    %cst_12 = arith.constant 0.000000e+00 : f32
    %38 = vector.broadcast %cst_12 : f32 to vector<8x16xf32>
    %39 = arith.maximumf %37, %38 : vector<8x16xf32>
    %cst_13 = arith.constant dense<0xFF800000> : vector<8xf32>
    %40 = vector.multi_reduction <maximumf>, %39, %cst_13 [1] : vector<8x16xf32> to vector<8xf32>
    %41 = vector.shape_cast %40 : vector<8xf32> to vector<8x1xf32>
    %42 = vector.broadcast %41 : vector<8x1xf32> to vector<8x16xf32>
    %43 = arith.subf %39, %42 : vector<8x16xf32>
    %44 = math.exp %43 : vector<8x16xf32>
    %cst_14 = arith.constant dense<0.000000e+00> : vector<8xf32>
    %45 = vector.multi_reduction <add>, %44, %cst_14 [1] : vector<8x16xf32> to vector<8xf32>
    %46 = vector.shape_cast %45 : vector<8xf32> to vector<8x1xf32>
    %47 = tpu.reciprocal %46 : vector<8x1xf32> -> vector<8x1xf32>
    %48 = vector.broadcast %47 : vector<8x1xf32> to vector<8x16xf32>
    %49 = arith.mulf %44, %48 : vector<8x16xf32>
    %c0_15 = arith.constant 0 : index
    %c0_16 = arith.constant 0 : index
    %50 = vector.load %arg2[%c0_15, %c0_16] : memref<8x16xf32, #tpu.memory_space<vmem>>, vector<8x16xf32>
    tpu.vector_store %arg2[%c0_15, %c0_16], %49 {strides = array<i32>} : memref<8x16xf32, #tpu.memory_space<vmem>>, vector<8x16xf32>,
    return
  }
}

</mosaic_0001>

<llo_original>
// kernel: item_policy_forward.1
$region0: #{item_policy_forward.1}
  #allocation0 [shape = 'u32[]', space=smem, size = 0x4, offset = 0x4, fixed_abs, tag = 'smem constant byte address 0x4 - core index']
  #allocation1 [shape = 'u32[144,128]{1,0:T(1,128)}', space=vmem, size = 0x12000, scoped, tag = 'internal scratch']
  %s0 = inlined_call_operand.vmem [shape: f32[8,42], index: 0, kind: input, shape index: {}]
  %s1 = inlined_call_operand.vmem [shape: f32[44,16], index: 1, kind: input, shape index: {}]
  %s2 = inlined_call_operand.hbm [shape: f32[8,16], index: 2, kind: output, shape index: {}]
  %s3 = sld [smem:[#allocation0]]
  $region18: #{item_policy_forward.1} parent=0
    _
  %s5 = ssub.s32 1, %s3
  %s6 = scalar_select 0, %s5, %s3
  $region1: #{item_policy_forward.1} parent=0
    #allocation2 [shape = 'u8[4096]{0}', space=vmem, size = 0x1000, scoped, tag = 'output window, operand 0, single buffered']
    #allocation3 [shape = 's32[1]{0}', space=sflag, size = 0x4, scoped, tag = 'scoped memory for item_policy_forward.1']
    %7 = vsyncpa [#allocation3], 0
    // Predicated region
    $region2: #{item_policy_forward.1} parent=1 // pred_check
      _
    $region3: #{item_policy_forward.1} parent=1 // pred_check_branch
      %9 = sbr.rel (0) target = $region5
    $region4: #{item_policy_forward.1} parent=1 // pred_region
      _
    $region5: #{item_policy_forward.1} parent=1 // pred_fallthru
      _
    // Predicated region
    $region6: #{item_policy_forward.1} parent=1 // pred_check
      _
    $region7: #{item_policy_forward.1} parent=1 // pred_check_branch
      %11 = sbr.rel (0) target = $region9
    $region8: #{item_policy_forward.1} parent=1 // pred_region
      _
    $region9: #{item_policy_forward.1} parent=1 // pred_fallthru
      _
    %v12 = vld [vmem:[%s0] sm:$0xff]
    %v13 = vlaneseq
    %v14 = vand.u32 %v13, 127
    %v15 = vcvt.f32.s32.to.zero.pseudo %v12
    %v16 = vsub.s32 %v14, 32
    %vm17 = vcmp.eq.s32.totalorder %v16, %v15
    %v18 = vsel %vm17, 1, 0
    %v19 = vcvt.s32.f32 %v18
    %vm20 = vcmp.lt.s32.totalorder %v14, 32
    %v21 = vsel %vm20, %v12, %v19
    %v22 = vld [vmem:[%s1] sm:$0xff]
    %v23 = vld [vmem:[%s1 + $0x8] sm:$0xff]
    %v24 = vld [vmem:[%s1 + $0x10] sm:$0xff]
    %v25 = vld [vmem:[%s1 + $0x18] sm:$0xff]
    %v26 = vld [vmem:[%s1 + $0x20] sm:$0xff]
    %v27 = vld [vmem:[%s1 + $0x28] sm:$0x3]
    %vm28 = vcmask 343040
    %v30 = vsel %vm28, %v21, 0
    %vm32 = vcmask 1041408
    %v34 = vsel %vm32, %v27, 0
    %36 = vmatprep.subr.mxu0 0.0
    %37 = vmatpush1.msra.mxu0 %v22
    %38 = vmatprep.subr.mxu0 0.0
    %39 = vmatpush1.msra.mxu0 %v23
    %40 = vmatprep.subr.mxu0 0.0
    %41 = vmatpush1.msra.mxu0 %v24
    %42 = vmatprep.subr.mxu0 0.0
    %43 = vmatpush1.msra.mxu0 %v25
    %44 = vmatprep.subr.mxu0 0.0
    %45 = vmatpush1.msra.mxu0 %v26
    %46 = vmatprep.subr.mxu0 0.0
    %47 = vmatpush1.msra.mxu0 %v34
    %48 = vmatprep.subr.mxu0 0.0
    %49 = vmatpush1.msra.mxu0 0.0
    %50 = vmatprep.subr.mxu0 0.0
    %51 = vmatpush1.msra.mxu0 0.0
    %52 = vmatprep.subr.mxu0 0.0
    %53 = vmatpush1.msra.mxu0 0.0
    %54 = vmatprep.subr.mxu0 0.0
    %55 = vmatpush1.msra.mxu0 0.0
    %56 = vmatprep.subr.mxu0 0.0
    %57 = vmatpush1.msra.mxu0 0.0
    %58 = vmatprep.subr.mxu0 0.0
    %59 = vmatpush1.msra.mxu0 0.0
    %60 = vmatprep.subr.mxu0 0.0
    %61 = vmatpush1.msra.mxu0 0.0
    %62 = vmatprep.subr.mxu0 0.0
    %63 = vmatpush1.msra.mxu0 0.0
    %64 = vmatprep.subr.mxu0 0.0
    %65 = vmatpush1.msra.mxu0 0.0
    %66 = vmatprep.subr.mxu0 0.0
    %67 = vmatpush1.msra.mxu0 0.0
    %68 = vmatprep.subr.mxu0 0.0
    %69 = vmatpush1.msra.mxu0 0.0
    %70 = vmatprep.subr.mxu0 0.0
    %71 = vmatpush1.msra.mxu0 0.0
    %72 = vmatprep.subr.mxu0 0.0
    %73 = vmatpush1.msra.mxu0 0.0
    %74 = vmatprep.subr.mxu0 0.0
    %75 = vmatpush1.msra.mxu0 0.0
    %76 = vmatprep.subr.mxu0 0.0
    %77 = vmatpush1.msra.mxu0 0.0
    %78 = vmatprep.subr.mxu0 0.0
    %79 = vmatpush1.msra.mxu0 0.0
    %80 = vmatprep.subr.mxu0 0.0
    %81 = vmatpush1.msra.mxu0 0.0
    %82 = vmatprep.subr.mxu0 0.0
    %83 = vmatpush1.msra.mxu0 0.0
    %84 = vmatprep.subr.mxu0 0.0
    %85 = vmatpush1.msra.mxu0 0.0
    %86 = vmatprep.subr.mxu0 0.0
    %87 = vmatpush1.msra.mxu0 0.0
    %88 = vmatprep.subr.mxu0 0.0
    %89 = vmatpush1.msra.mxu0 0.0
    %90 = vmatprep.subr.mxu0 0.0
    %91 = vmatpush1.msra.mxu0 0.0
    %92 = vmatprep.subr.mxu0 0.0
    %93 = vmatpush1.msra.mxu0 0.0
    %94 = vmatprep.subr.mxu0 0.0
    %95 = vmatpush1.msra.mxu0 0.0
    %96 = vmatprep.subr.mxu0 0.0
    %97 = vmatpush1.msra.mxu0 0.0
    %98 = vmatprep.subr.mxu0 0.0
    %99 = vmatpush1.msra.mxu0 0.0
    %100 = vmatprep.mubr.f32.mxu0 0.0
    %101 = vmatmul.mubr.f32.gmra.mrb[0].mxu0 %v30
    %v102 = vpop.f32.mrb[0].mxu0
    %v103 = vadd.f32 0.0, %v102
    %v104 = vpop.f32.mrb[0].mxu0
    %105 = vdwg.mxu0
    %vm106 = vcmask 130048
    %v107 = vsel %vm106, %v103, 0.0
    %v108 = vrot.slane %v107, 4
    %v109 = vadd.f32 %v107, %v108
    %v110 = vrot.slane %v109, 2
    %v111 = vadd.f32 %v109, %v110
    %v112 = vrot.slane %v111, 1
    %v113 = vadd.f32 %v111, %v112
    %v114 = vmul.f32 %v113, 0.125
    %v115 = vmul.f32 %v103, %v103
    %v116 = vsel %vm106, %v115, 0.0
    %v117 = vrot.slane %v116, 4
    %v118 = vadd.f32 %v116, %v117
    %v119 = vrot.slane %v118, 2
    %v120 = vadd.f32 %v118, %v119
    %v121 = vrot.slane %v120, 1
    %v122 = vadd.f32 %v120, %v121
    %v123 = vmul.f32 %v122, 0.125
    %v124 = vmul.f32 %v114, %v114
    %v125 = vsub.f32 %v123, %v124
    %v126 = vmax.f32 %v125, 0.0
    %v127 = vld [vmem:[%s1 + $0x2a] sm:$0x1]
    %v128 = vld [vmem:[%s1 + $0x2b] sm:$0x1]
    %v129 = vadd.f32 %v126, 1e-05
    %v130 = vrsqrt.pop %v129
    %v131 = vmul.f32 %v127, %v130
    %v132 = vmul.f32 %v114, %v131
    %v133 = vsub.f32 %v128, %v132
    %v134 = vlaneseq
    %v135 = vshrl.u32 %v134, 7
    %v136 = vsub.s32 0, %v135
    %v137 = vrot.slane %v131, %v136
    %v138 = vmul.f32 %v103, %v137
    %v139 = vlaneseq
    %v140 = vshrl.u32 %v139, 7
    %v141 = vsub.s32 0, %v140
    %v142 = vrot.slane %v133, %v141
    %v143 = vadd.f32 %v138, %v142
    %v144 = vmax.f32 %v143, 0.0
    %v145 = vsel %vm106, %v144, -inf
    %146 = vmax.xlane.f32.xlu0 %v145
    %v147 = vpop.xlane.xlu0 %146
    %v148 = vsub.f32 %v144, %v147
    %v149 = vmul.f32 %v148, 1.442695
    %v150 = vpow.pop %v149
    %v151 = vsel %vm106, %v150, 0.0
    %152 = vadd.xlane.f32.xlu0 %v151
    %v153 = vpop.xlane.xlu0 %152
    %v154 = vrcp.pop %v153
    %v155 = vmul.f32 %v150, %v154
    %156 = vst.msk [vmem:[#allocation2] sm:$0xff] %vm106, %v155
    // Predicated region
    $region10: #{item_policy_forward.1} parent=1 // pred_check
      _
    $region11: #{item_policy_forward.1} parent=1 // pred_check_branch
      %158 = sbr.rel (0) target = $region13
    $region12: #{item_policy_forward.1} parent=1 // pred_region
      %s160 = ssub.s32 128, 128
      %161 = vsyncadd [#allocation3], %s160
      %s163 = sshll.u32 [#allocation2], 4
      %s164 = int_to_ptr.vmem [resolvable:$true] %s163
      %166 = dma.vmem_to_hbm [thread:$0]  %s164, 128, %s2, [#allocation3]
    $region13: #{item_policy_forward.1} parent=1 // pred_fallthru
      _
    // Predicated region
    $region14: #{item_policy_forward.1} parent=1 // pred_check
      _
    $region15: #{item_policy_forward.1} parent=1 // pred_check_branch
      %168 = sbr.rel (0) target = $region17
    $region16: #{item_policy_forward.1} parent=1 // pred_region
      %169 = dma.done [#allocation3], 128
    $region17: #{item_policy_forward.1} parent=1 // pred_fallthru
      _
    %170 = vsyncpa [#allocation3], 1

</llo_original>
